<compile_context>
chip_gen: v6e
topology: v6e:2x2x1
jax: 0.10.0
libtpu: 0.0.40
codegen_flags: <defaults>
</compile_context>

<pallas_src>
import functools

import jax
import jax.numpy as jnp
from jax import lax
from jax.experimental import pallas as pl
from jax.experimental.pallas import tpu as pltpu


def _additive_attention_kernel(has_mask, *refs):
    if has_mask:
        x_ref, mask_ref, w1_ref, b1_ref, w2_ref, b2_ref, o_ref = refs
    else:
        x_ref, w1_ref, b1_ref, w2_ref, b2_ref, o_ref = refs
        mask_ref = None

    TB, S, D = x_ref.shape
    H = w1_ref.shape[0]

    x = x_ref[...]                                     # (TB, S, D), native dtype
    x2 = x.reshape(TB * S, D)                          # leading-dim merge: layout-free

    # att_fc1 + tanh on the MXU: contract on D directly against W1 (H, D)
    # (no pre-transposed copy of W1), f32 accumulation.
    e = lax.dot_general(
        x2, w1_ref[...],
        dimension_numbers=(((1,), (1,)), ((), ())),
        preferred_element_type=jnp.float32)            # (TB*S, H) f32
    e = jnp.tanh(e + b1_ref[...].astype(jnp.float32))  # bias + EUP tanh

    # att_fc2 (out_features == 1): VPU multiply + lane reduce over H.
    # Result kept lane-dense as (TB, S).
    logit = jnp.sum(e.reshape(TB, S, H) * w2_ref[...].astype(jnp.float32),
                    axis=-1) + b2_ref[0]               # (TB, S)

    alpha = jnp.exp(logit)                             # (TB, S)  (matches reference: no max-sub)
    if mask_ref is not None:
        alpha = alpha * mask_ref[...].astype(jnp.float32)

    # Per-sequence normalization (lane reduce per row), matches /(sum + 1e-8).
    alpha = alpha / (jnp.sum(alpha, axis=-1, keepdims=True) + 1e-8)

    # Attention pooling: out[b, d] = sum_s alpha[b, s] * x[b, s, d]
    pooled = jnp.sum(alpha[:, :, None] * x.astype(jnp.float32), axis=1)  # (TB, D) f32
    o_ref[...] = pooled.astype(o_ref.dtype)            # sublane/lane-dense store


def _choose_batch_tile(B, S, D, itemsize):
    """Pick TB: multiple of 8, conservative VMEM budget, >=2 grid steps when possible."""
    if B <= 8:
        return B                                       # block == full array dim -> always legal
    budget = 4 * 1024 * 1024                           # ~4 MiB per x buffer (double-buffered)
    tb = max(8, (budget // max(1, S * D * itemsize)) // 8 * 8)
    # Keep at least 2 grid steps so v7x's two TensorCores both get batch work.
    tb = min(tb, max(8, (B // 2) // 8 * 8))
    return tb


@functools.partial(jax.jit, static_argnames=("batch_tile",))
def additive_attention(x, w1, b1, w2, b2, attn_mask=None, *, batch_tile=None):
    """x: (B, S, D). w1: (H, D), b1: (H,), w2: (1, H), b2: (1,).
    attn_mask: optional (B, S). Returns (B, D)."""
    B, S, D = x.shape
    H = w1.shape[0]
    has_mask = attn_mask is not None

    TB = batch_tile if batch_tile is not None else _choose_batch_tile(
        B, S, D, jnp.dtype(x.dtype).itemsize)
    Bp = -(-B // TB) * TB                              # pad batch to a multiple of TB

    if Bp != B:
        x = jnp.pad(x, ((0, Bp - B), (0, 0), (0, 0)))
        if has_mask:
            attn_mask = jnp.pad(attn_mask, ((0, Bp - B), (0, 0)))

    # Parameters: MXU operand in x's dtype, biases/w2 as-is (f32 math in-kernel).
    w1k = w1.astype(x.dtype)                           # (H, D), consumed transposed by the MXU
    b1r = b1.reshape(1, H)
    w2r = w2.reshape(1, H)
    b2s = b2.reshape(1).astype(jnp.float32)            # scalar -> SMEM

    in_specs = [pl.BlockSpec((TB, S, D), lambda b: (b, 0, 0))]          # x tile
    inputs = [x]
    if has_mask:
        in_specs.append(pl.BlockSpec((TB, S), lambda b: (b, 0)))        # lane-dense mask
        inputs.append(attn_mask)
    in_specs += [
        pl.BlockSpec((H, D), lambda b: (0, 0)),                         # W1 (VMEM-resident)
        pl.BlockSpec((1, H), lambda b: (0, 0)),                         # b1
        pl.BlockSpec((1, H), lambda b: (0, 0)),                         # W2 row
        pl.BlockSpec(memory_space=pltpu.MemorySpace.SMEM),              # b2 scalar
    ]
    inputs += [w1k, b1r, w2r, b2s]

    out = pl.pallas_call(
        functools.partial(_additive_attention_kernel, has_mask),
        out_shape=jax.ShapeDtypeStruct((Bp, D), x.dtype),
        grid_spec=pltpu.PrefetchScalarGridSpec(
            num_scalar_prefetch=0,
            grid=(Bp // TB,),
            in_specs=in_specs,
            out_specs=pl.BlockSpec((TB, D), lambda b: (b, 0)),
        ),
        compiler_params=pltpu.CompilerParams(
            dimension_semantics=("parallel",)),
    )(*inputs)

    return out[:B] if Bp != B else out


def _xavier_uniform(key, shape, gain=1.0):
    fan_out, fan_in = shape   # PyTorch Linear weight is (out_features, in_features)
    bound = gain * (6.0 / (fan_in + fan_out)) ** 0.5
    return jax.random.uniform(key, shape, jnp.float32, -bound, bound)


def _reference(x, w1, b1, w2, b2, attn_mask=None):
    e = jnp.tanh(x @ w1.T + b1)                            # (B, S, H)
    alpha = jnp.exp(e @ w2.T + b2)                         # (B, S, 1)
    if attn_mask is not None:
        alpha = alpha * attn_mask[..., None]
    alpha = alpha / (jnp.sum(alpha, axis=1, keepdims=True) + 1e-8)
    return jnp.sum(alpha * x, axis=1)                      # (B, D)


if __name__ == "__main__":
    key = jax.random.PRNGKey(0)
    k1, k2, k3, k4 = jax.random.split(key, 4)

    batch, seq, d_h, hidden = 2, 8, 32, 64

    # Deterministic parameter init mirroring the module's __init__.
    gain = 5.0 / 3.0   # nn.init.calculate_gain('tanh')
    w1 = _xavier_uniform(k1, (hidden, d_h), gain)          # att_fc1.weight
    b1 = jnp.full((hidden,), 0.01, jnp.float32)            # att_fc1.bias
    w2 = _xavier_uniform(k2, (1, hidden), gain)            # att_fc2.weight
    b2 = jnp.full((1,), 0.01, jnp.float32)                 # att_fc2.bias

    x = jax.random.normal(k3, (batch, seq, d_h), jnp.float32)
    mask = (jax.random.uniform(k4, (batch, seq)) > 0.3).astype(jnp.float32)

    # No-mask path.
    out = jax.block_until_ready(additive_attention(x, w1, b1, w2, b2))
    ref = _reference(x, w1, b1, w2, b2)
    assert out.shape == (batch, d_h)
    assert jnp.allclose(out, ref, atol=1e-5, rtol=1e-5)

    # Masked path.
    out_m = jax.block_until_ready(additive_attention(x, w1, b1, w2, b2, mask))
    ref_m = _reference(x, w1, b1, w2, b2, mask)
    assert jnp.allclose(out_m, ref_m, atol=1e-5, rtol=1e-5)

    print("KERNEL_OK")
</pallas_src>

<mosaic_0001>
module attributes {stable_mosaic.version = 11 : i64} {
  func.func @_additive_attention_kernel(%arg0: i32, %arg1: memref<2x8x32xf32, #tpu.memory_space<vmem>>, %arg2: memref<64x32xf32, #tpu.memory_space<vmem>>, %arg3: memref<1x64xf32, #tpu.memory_space<vmem>>, %arg4: memref<1x64xf32, #tpu.memory_space<vmem>>, %arg5: memref<1xf32, #tpu.memory_space<smem>>, %arg6: memref<2x32xf32, #tpu.memory_space<vmem>>) attributes {dimension_semantics = [#tpu.dimension_semantics<parallel>], iteration_bounds = array<i64: 1>, scalar_prefetch = 0 : i64, scratch_operands = 0 : i64, tpu.core_type = #tpu.core_type<tc>, window_params = [{transform_indices = @transform_0, window_bounds = array<i64: 2, 8, 32>}, {pipeline_mode = #tpu.pipeline_mode<synchronous>, transform_indices = @transform_1, window_bounds = array<i64: 64, 32>}, {pipeline_mode = #tpu.pipeline_mode<synchronous>, transform_indices = @transform_2, window_bounds = array<i64: 1, 64>}, {pipeline_mode = #tpu.pipeline_mode<synchronous>, transform_indices = @transform_3, window_bounds = array<i64: 1, 64>}, {transform_indices = @transform_4, window_bounds = array<i64: 1>}, {transform_indices = @transform_5, window_bounds = array<i64: 2, 32>}]} {
    %c0 = arith.constant 0 : index
    %c0_0 = arith.constant 0 : index
    %c0_1 = arith.constant 0 : index
    %0 = vector.load %arg1[%c0, %c0_0, %c0_1] : memref<2x8x32xf32, #tpu.memory_space<vmem>>, vector<2x8x32xf32>
    %1 = vector.shape_cast %0 : vector<2x8x32xf32> to vector<16x32xf32>
    %c0_2 = arith.constant 0 : index
    %c0_3 = arith.constant 0 : index
    %2 = vector.load %arg2[%c0_2, %c0_3] : memref<64x32xf32, #tpu.memory_space<vmem>>, vector<64x32xf32>
    %cst = arith.constant dense<0.000000e+00> : vector<16x64xf32>
    %3 = tpu.matmul %1, %2, %cst {dimension_numbers = #tpu.dot_dimension_numbers<[1], [1], [0], [0], [0, 0, 1, 0], [], []>} : vector<16x32xf32>, vector<64x32xf32>, vector<16x64xf32> -> vector<16x64xf32>
    %c0_4 = arith.constant 0 : index
    %c0_5 = arith.constant 0 : index
    %4 = vector.load %arg3[%c0_4, %c0_5] : memref<1x64xf32, #tpu.memory_space<vmem>>, vector<1x64xf32>
    %5 = vector.broadcast %4 : vector<1x64xf32> to vector<16x64xf32>
    %6 = arith.addf %3, %5 : vector<16x64xf32>
    %7 = math.tanh %6 : vector<16x64xf32>
    %8 = vector.shape_cast %7 : vector<16x64xf32> to vector<2x8x64xf32>
    %c0_6 = arith.constant 0 : index
    %c0_7 = arith.constant 0 : index
    %9 = vector.load %arg4[%c0_6, %c0_7] : memref<1x64xf32, #tpu.memory_space<vmem>>, vector<1x64xf32>
    %10 = vector.shape_cast %9 : vector<1x64xf32> to vector<1x1x64xf32>
    %11 = vector.broadcast %10 : vector<1x1x64xf32> to vector<2x8x64xf32>
    %12 = arith.mulf %8, %11 : vector<2x8x64xf32>
    %cst_8 = arith.constant dense<0.000000e+00> : vector<2x8xf32>
    %13 = vector.multi_reduction <add>, %12, %cst_8 [2] : vector<2x8x64xf32> to vector<2x8xf32>
    %c0_9 = arith.constant 0 : index
    %14 = memref.load %arg5[%c0_9] : memref<1xf32, #tpu.memory_space<smem>>
    %15 = vector.broadcast %14 : f32 to vector<2x8xf32>
    %16 = arith.addf %13, %15 : vector<2x8xf32>
    %17 = math.exp %16 : vector<2x8xf32>
    %cst_10 = arith.constant dense<0.000000e+00> : vector<2xf32>
    %18 = vector.multi_reduction <add>, %17, %cst_10 [1] : vector<2x8xf32> to vector<2xf32>
    %19 = vector.shape_cast %18 : vector<2xf32> to vector<2x1xf32>
    %cst_11 = arith.constant 9.99999993E-9 : f32
    %20 = vector.broadcast %cst_11 : f32 to vector<2x1xf32>
    %21 = arith.addf %19, %20 : vector<2x1xf32>
    %22 = vector.broadcast %21 : vector<2x1xf32> to vector<2x8xf32>
    %23 = arith.divf %17, %22 : vector<2x8xf32>
    %24 = vector.shape_cast %23 : vector<2x8xf32> to vector<2x8x1xf32>
    %25 = vector.broadcast %24 : vector<2x8x1xf32> to vector<2x8x32xf32>
    %26 = arith.mulf %25, %0 : vector<2x8x32xf32>
    %cst_12 = arith.constant dense<0.000000e+00> : vector<2x32xf32>
    %27 = vector.multi_reduction <add>, %26, %cst_12 [1] : vector<2x8x32xf32> to vector<2x32xf32>
    %c0_13 = arith.constant 0 : index
    %c0_14 = arith.constant 0 : index
    %28 = vector.load %arg6[%c0_13, %c0_14] : memref<2x32xf32, #tpu.memory_space<vmem>>, vector<2x32xf32>
    tpu.vector_store %arg6[%c0_13, %c0_14], %27 {strides = array<i32>} : memref<2x32xf32, #tpu.memory_space<vmem>>, vector<2x32xf32>,
    return
  }
  func.func @transform_0(%arg0: i32) -> (i32, i32, i32) {
    %c0_i32 = arith.constant 0 : i32
    %c0_i32_0 = arith.constant 0 : i32
    %c0_i32_1 = arith.constant 0 : i32
    return %arg0, %c0_i32, %c0_i32_0 : i32, i32, i32
  }
  func.func @transform_1(%arg0: i32) -> (i32, i32) {
    %c0_i32 = arith.constant 0 : i32
    %c0_i32_0 = arith.constant 0 : i32
    %c0_i32_1 = arith.constant 0 : i32
    return %c0_i32, %c0_i32_0 : i32, i32
  }
  func.func @transform_2(%arg0: i32) -> (i32, i32) {
    %c0_i32 = arith.constant 0 : i32
    %c0_i32_0 = arith.constant 0 : i32
    %c0_i32_1 = arith.constant 0 : i32
    return %c0_i32, %c0_i32_0 : i32, i32
  }
  func.func @transform_3(%arg0: i32) -> (i32, i32) {
    %c0_i32 = arith.constant 0 : i32
    %c0_i32_0 = arith.constant 0 : i32
    %c0_i32_1 = arith.constant 0 : i32
    return %c0_i32, %c0_i32_0 : i32, i32
  }
  func.func @transform_4(%arg0: i32) -> i32 {
    %c0_i32 = arith.constant 0 : i32
    %c0_i32_0 = arith.constant 0 : i32
    return %c0_i32 : i32
  }
  func.func @transform_5(%arg0: i32) -> (i32, i32) {
    %c0_i32 = arith.constant 0 : i32
    %c0_i32_0 = arith.constant 0 : i32
    return %arg0, %c0_i32 : i32, i32
  }
}

</mosaic_0001>

<llo_original>
// kernel: additive_attention.1
$region0: #{additive_attention.1}
  #allocation0 [shape = 'u32[]', space=smem, size = 0x4, offset = 0x4, fixed_abs, tag = 'smem constant byte address 0x4 - core index']
  #allocation1 [shape = 'u32[144,128]{1,0:T(1,128)}', space=vmem, size = 0x12000, scoped, tag = 'internal scratch']
  #allocation2 [shape = 'f32[1]{0:T(128)S(6)}', space=smem, size = 0x200, scoped, tag = 'scoped memory for additive_attention.1']
  %s0 = inlined_call_operand.vmem [shape: f32[2,8,32], index: 0, kind: input, shape index: {}]
  %s1 = inlined_call_operand.vmem [shape: f32[64,32], index: 1, kind: input, shape index: {}]
  %s2 = inlined_call_operand.vmem [shape: f32[1,64], index: 2, kind: input, shape index: {}]
  %s3 = inlined_call_operand.vmem [shape: f32[1,64], index: 3, kind: input, shape index: {}]
  %s4 = inlined_call_operand.<no memory space> [shape: f32[1], index: 4, kind: input, shape index: {}]
  %s5 = inlined_call_operand.hbm [shape: f32[2,32], index: 5, kind: output, shape index: {}]
  %s6 = sld [smem:[#allocation0]]
  $region30: #{additive_attention.1} parent=0
    _
  %s8 = ssub.s32 1, %s6
  %s9 = scalar_select 0, %s8, %s6
  %10 = sst [smem:[#allocation2]] %s4
  $region1: #{additive_attention.1} parent=0
    #allocation3 [shape = 'u8[1024]{0}', space=vmem, size = 0x400, scoped, tag = 'output window, operand 0, single buffered']
    #allocation4 [shape = 's32[1]{0}', space=sflag, size = 0x4, scoped, tag = 'scoped memory for additive_attention.1']
    %11 = vsyncpa [#allocation4], 0
    // Predicated region
    $region2: #{additive_attention.1} parent=1 // pred_check
      _
    $region3: #{additive_attention.1} parent=1 // pred_check_branch
      %13 = sbr.rel (0) target = $region5
    $region4: #{additive_attention.1} parent=1 // pred_region
      _
    $region5: #{additive_attention.1} parent=1 // pred_fallthru
      _
    // Predicated region
    $region6: #{additive_attention.1} parent=1 // pred_check
      _
    $region7: #{additive_attention.1} parent=1 // pred_check_branch
      %15 = sbr.rel (0) target = $region9
    $region8: #{additive_attention.1} parent=1 // pred_region
      _
    $region9: #{additive_attention.1} parent=1 // pred_fallthru
      _
    // Predicated region
    $region10: #{additive_attention.1} parent=1 // pred_check
      _
    $region11: #{additive_attention.1} parent=1 // pred_check_branch
      %17 = sbr.rel (0) target = $region13
    $region12: #{additive_attention.1} parent=1 // pred_region
      _
    $region13: #{additive_attention.1} parent=1 // pred_fallthru
      _
    // Predicated region
    $region14: #{additive_attention.1} parent=1 // pred_check
      _
    $region15: #{additive_attention.1} parent=1 // pred_check_branch
      %19 = sbr.rel (0) target = $region17
    $region16: #{additive_attention.1} parent=1 // pred_region
      _
    $region17: #{additive_attention.1} parent=1 // pred_fallthru
      _
    // Predicated region
    $region18: #{additive_attention.1} parent=1 // pred_check
      _
    $region19: #{additive_attention.1} parent=1 // pred_check_branch
      %21 = sbr.rel (0) target = $region21
    $region20: #{additive_attention.1} parent=1 // pred_region
      _
    $region21: #{additive_attention.1} parent=1 // pred_fallthru
      _
    %v22 = vld [vmem:[%s0] sm:$0xff]
    %v23 = vld [vmem:[%s0 + $0x8] sm:$0xff]
    %v24 = vld [vmem:[%s1] sm:$0xff]
    %v25 = vld [vmem:[%s1 + $0x8] sm:$0xff]
    %v26 = vld [vmem:[%s1 + $0x10] sm:$0xff]
    %v27 = vld [vmem:[%s1 + $0x18] sm:$0xff]
    %v28 = vld [vmem:[%s1 + $0x20] sm:$0xff]
    %v29 = vld [vmem:[%s1 + $0x28] sm:$0xff]
    %v30 = vld [vmem:[%s1 + $0x30] sm:$0xff]
    %v31 = vld [vmem:[%s1 + $0x38] sm:$0xff]
    %v32 = vld [vmem:[%s2] sm:$0x1]
    %v34 = vlaneseq
    %v35 = vshrl.u32 %v34, 7
    %v36 = vsub.s32 0, %v35
    %v37 = vrot.slane %v32, %v36
    %vm39 = vcmask 261120
    %v41 = vsel %vm39, %v22, 0
    %v44 = vsel %vm39, %v23, 0
    %v47 = vsel %vm39, %v24, 0
    %v50 = vsel %vm39, %v25, 0
    %v53 = vsel %vm39, %v26, 0
    %v56 = vsel %vm39, %v27, 0
    %v59 = vsel %vm39, %v28, 0
    %v62 = vsel %vm39, %v29, 0
    %v65 = vsel %vm39, %v30, 0
    %v68 = vsel %vm39, %v31, 0
    %70 = vmatprep.subr.mxu0 0.0
    %71 = vmatpush1.xpose.msra.mxu0 0.0
    %72 = vmatprep.subr.mxu0 0.0
    %73 = vmatpush1.xpose.msra.mxu0 0.0
    %74 = vmatprep.subr.mxu0 0.0
    %75 = vmatpush1.xpose.msra.mxu0 0.0
    %76 = vmatprep.subr.mxu0 0.0
    %77 = vmatpush1.xpose.msra.mxu0 0.0
    %78 = vmatprep.subr.mxu0 0.0
    %79 = vmatpush1.xpose.msra.mxu0 0.0
    %80 = vmatprep.subr.mxu0 0.0
    %81 = vmatpush1.xpose.msra.mxu0 0.0
    %82 = vmatprep.subr.mxu0 0.0
    %83 = vmatpush1.xpose.msra.mxu0 0.0
    %84 = vmatprep.subr.mxu0 0.0
    %85 = vmatpush1.xpose.msra.mxu0 0.0
    %86 = vmatprep.subr.mxu0 0.0
    %87 = vmatpush1.xpose.msra.mxu0 %v68
    %88 = vmatprep.subr.mxu0 0.0
    %89 = vmatpush1.xpose.msra.mxu0 %v65
    %90 = vmatprep.subr.mxu0 0.0
    %91 = vmatpush1.xpose.msra.mxu0 %v62
    %92 = vmatprep.subr.mxu0 0.0
    %93 = vmatpush1.xpose.msra.mxu0 %v59
    %94 = vmatprep.subr.mxu0 0.0
    %95 = vmatpush1.xpose.msra.mxu0 %v56
    %96 = vmatprep.subr.mxu0 0.0
    %97 = vmatpush1.xpose.msra.mxu0 %v53
    %98 = vmatprep.subr.mxu0 0.0
    %99 = vmatpush1.xpose.msra.mxu0 %v50
    %100 = vmatprep.subr.mxu0 0.0
    %101 = vmatpush1.xpose.msra.mxu0 %v47
    %102 = vmatprep.subr.mxu0 0.0
    %103 = vmatpush2.xpose.msra.mxu0 0.0
    %104 = vmatprep.subr.mxu0 0.0
    %105 = vmatpush2.xpose.msra.mxu0 0.0
    %106 = vmatprep.subr.mxu0 0.0
    %107 = vmatpush2.xpose.msra.mxu0 0.0
    %108 = vmatprep.subr.mxu0 0.0
    %109 = vmatpush2.xpose.msra.mxu0 0.0
    %110 = vmatprep.subr.mxu0 0.0
    %111 = vmatpush2.xpose.msra.mxu0 0.0
    %112 = vmatprep.subr.mxu0 0.0
    %113 = vmatpush2.xpose.msra.mxu0 0.0
    %114 = vmatprep.subr.mxu0 0.0
    %115 = vmatpush2.xpose.msra.mxu0 0.0
    %116 = vmatprep.subr.mxu0 0.0
    %117 = vmatpush2.xpose.msra.mxu0 0.0
    %118 = vmatprep.subr.mxu0 0.0
    %119 = vmatpush2.xpose.msra.mxu0 0.0
    %120 = vmatprep.subr.mxu0 0.0
    %121 = vmatpush2.xpose.msra.mxu0 0.0
    %122 = vmatprep.subr.mxu0 0.0
    %123 = vmatpush2.xpose.msra.mxu0 0.0
    %124 = vmatprep.subr.mxu0 0.0
    %125 = vmatpush2.xpose.msra.mxu0 0.0
    %126 = vmatprep.subr.mxu0 0.0
    %127 = vmatpush2.xpose.msra.mxu0 0.0
    %128 = vmatprep.subr.mxu0 0.0
    %129 = vmatpush2.xpose.msra.mxu0 0.0
    %130 = vmatprep.subr.mxu0 0.0
    %131 = vmatpush2.xpose.msra.mxu0 0.0
    %132 = vmatprep.subr.mxu0 0.0
    %133 = vmatpush2.xpose.msra.mxu0 0.0
    %134 = vmatprep.mubr.f32.mxu0 0.0
    %135 = vmatmul.mubr.f32.gmra.mxu0 %v41
    %v136 = vpop.f32.mrf.mxu0
    %v137 = vadd.f32 %v37, %v136
    %v138 = vpop.f32.mrf.mxu0
    %139 = vmatprep.mubr.f32.mxu0 0.0
    %140 = vmatmul.mubr.f32.gmra.mxu0 %v44
    %v141 = vpop.f32.mrf.mxu0
    %v142 = vadd.f32 %v37, %v141
    %v143 = vpop.f32.mrf.mxu0
    %144 = vdwg.mxu0
    %v145 = vtanh.pop %v137
    %v146 = vtanh.pop %v142
    %v147 = vld [vmem:[%s3] sm:$0x1]
    %v149 = vlaneseq
    %v150 = vshrl.u32 %v149, 7
    %v151 = vsub.s32 0, %v150
    %v152 = vrot.slane %v147, %v151
    %v154 = vmul.f32 %v145, %v152
    %v155 = vmul.f32 %v146, %v152
    %vm156 = vcmask 523264
    %v157 = vsel %vm156, %v154, 0.0
    %158 = vadd.xlane.f32.xlu0 %v157
    %v159 = vpop.xlane.xlu0 %158
    %v160 = vsel %vm156, %v155, 0.0
    %161 = vadd.xlane.f32.xlu0 %v160
    %v162 = vpop.xlane.xlu0 %161
    %s163 = sld [smem:[#allocation2]]
    %v164 = vstv %s163
    %v165 = vadd.f32 %v159, %v164
    %v166 = vadd.f32 %v162, %v164
    %v167 = vmul.f32 %v165, 1.442695
    %v168 = vpow.pop %v167
    %v169 = vmul.f32 %v166, 1.442695
    %v170 = vpow.pop %v169
    %v173 = vlaneseq
    %v174 = vand.u32 %v173, 127
    %v175 = vlaneseq
    %v176 = vshrl.u32 %v175, 7
    %v177 = vsub.s32 %v174, %v176
    %v178 = vrot.slane %v168, %v177
    %v179 = vlaneseq
    %v180 = vshrl.u32 %v179, 7
    %v181 = vsub.s32 %v174, %v180
    %v182 = vrot.slane %v170, %v181
    %vm183 = vcmask 1041409
    %v184 = vsel %vm183, %v182, %v178
    %vm186 = vcmask 58368
    %v187 = vsel %vm186, %v184, 0.0
    %188 = vadd.xlane.f32.xlu0 %v187
    %v189 = vpop.xlane.xlu0 %188
    %v190 = vadd.f32 %v189, 1e-08
    %v192 = vlaneseq
    %v193 = vshrl.u32 %v192, 7
    %v194 = vsub.s32 0, %v193
    %v195 = vrot.slane %v190, %v194
    %v196 = vlaneseq
    %v197 = vshrl.u32 %v196, 7
    %v198 = vsub.s32 1, %v197
    %v199 = vrot.slane %v190, %v198
    %v202 = vrcp.pop %v195
    %v203 = vmul.f32 %v168, %v202
    %v204 = vrcp.pop %v199
    %v205 = vmul.f32 %v170, %v204
    %207 = vset.pattern.permute.xlu0 0
    %208 = vperm.xlu0 %207, %v203
    %v209 = vpop.permute.xlu0 %208
    %212 = vset.pattern.permute.xlu0 0
    %213 = vperm.xlu0 %212, %v205
    %v214 = vpop.permute.xlu0 %213
    %v216 = vmul.f32 %v209, %v22
    %v217 = vmul.f32 %v214, %v23
    %v218 = vsel %vm39, %v216, 0.0
    %v219 = vrot.slane %v218, 4
    %v220 = vadd.f32 %v218, %v219
    %v221 = vrot.slane %v220, 2
    %v222 = vadd.f32 %v220, %v221
    %v223 = vrot.slane %v222, 1
    %v224 = vadd.f32 %v222, %v223
    %v225 = vsel %vm39, %v217, 0.0
    %v226 = vrot.slane %v225, 4
    %v227 = vadd.f32 %v225, %v226
    %v228 = vrot.slane %v227, 2
    %v229 = vadd.f32 %v227, %v228
    %v230 = vrot.slane %v229, 1
    %v231 = vadd.f32 %v229, %v230
    %v234 = vsel %vm183, %v231, %v224
    %vm236 = vcmask 254976
    %237 = vst.msk [vmem:[#allocation3] sm:$0x3] %vm236, %v234
    // Predicated region
    $region22: #{additive_attention.1} parent=1 // pred_check
      _
    $region23: #{additive_attention.1} parent=1 // pred_check_branch
      %239 = sbr.rel (0) target = $region25
    $region24: #{additive_attention.1} parent=1 // pred_region
      %s241 = ssub.s32 32, 32
      %242 = vsyncadd [#allocation4], %s241
      %s244 = sshll.u32 [#allocation3], 4
      %s245 = int_to_ptr.vmem [resolvable:$true] %s244
      %247 = dma.vmem_to_hbm [thread:$0]  %s245, 32, %s5, [#allocation4]
    $region25: #{additive_attention.1} parent=1 // pred_fallthru
      _
    // Predicated region
    $region26: #{additive_attention.1} parent=1 // pred_check
      _
    $region27: #{additive_attention.1} parent=1 // pred_check_branch
      %249 = sbr.rel (0) target = $region29
    $region28: #{additive_attention.1} parent=1 // pred_region
      %250 = dma.done [#allocation4], 32
    $region29: #{additive_attention.1} parent=1 // pred_fallthru
      _
    %251 = vsyncpa [#allocation4], 1

</llo_original>
